<compile_context>
chip_gen: v6e
topology: v6e:2x2x1
jax: 0.10.0
libtpu: 0.0.40
codegen_flags: <defaults>
</compile_context>

<pallas_src>
import jax
import jax.numpy as jnp
from jax.experimental import pallas as pl
from jax.experimental.pallas import tpu as pltpu


def scaled_poisson_kernel(x_ref, w_ref, b_ref, l_ref, rate_ref):
    # logits = x @ W + b   (bf16 inputs -> native MXU, f32 accumulate)
    logits = jnp.dot(x_ref[...], w_ref[...], preferred_element_type=jnp.float32)
    logits = logits + b_ref[...]                       # (TB, Dout) + (1, Dout)

    # Numerically-stable softmax over the last (lane) axis, all in f32.
    m = jnp.max(logits, axis=-1, keepdims=True)        # (TB, 1)   XLU reduce
    e = jnp.exp(logits - m)                            # (TB, Dout) EUP
    denom = jnp.sum(e, axis=-1, keepdims=True)         # (TB, 1)   XLU reduce

    # Approx reciprocal on the EUP slot + one Newton step (restores ~2^-24 rel
    # accuracy), with the per-row Poisson scale `l` folded in so only a single
    # (TB, Dout) multiply remains.
    r = pl.reciprocal(denom, approx=True)              # (TB, 1)
    r = r * (2.0 - denom * r)                          # Newton refinement
    inv = l_ref[...] * r                               # (TB, 1)

    rate_ref[...] = (e * inv).astype(rate_ref.dtype)   # (TB, Dout)


def scaled_poisson_rate(x, w_t, b, l, *, block_b=None):
    """rate = softmax(x @ w_t + b, -1) * l, computed with a batch-tiled kernel.

    x:   (B, Din)    float  (cast to bf16 for the MXU)
    w_t: (Din, Dout) float  (Linear weight, pre-transposed; cast to bf16)
    b:   (Dout,) or (1, Dout) float32
    l:   (B, 1)      float32 per-row scale
    returns (B, Dout) float32 Poisson rates.
    """
    B, Din = x.shape
    Dout = w_t.shape[1]

    if block_b is None:
        # Large batch tile to amortize the ~0.35us/step overhead while staying
        # far below the scoped VMEM limit (conservative for v7x's 64 MiB VMEM).
        block_b = min(B, 512)

    # Pad the batch so the grid divides evenly (padded rows are dropped at the
    # end; softmax is per-row so they never contaminate valid rows).
    pad = (-B) % block_b
    if pad:
        x = jnp.pad(x, ((0, pad), (0, 0)))
        l = jnp.pad(l, ((0, pad), (0, 0)), constant_values=1.0)
    Bp = B + pad

    # bf16 matmul inputs (native MXU on v5e/v6e/v7x); everything else f32.
    x_bf = x.astype(jnp.bfloat16)
    w_bf = w_t.astype(jnp.bfloat16)
    b2 = jnp.asarray(b, dtype=jnp.float32).reshape(1, Dout)
    l_f = l.astype(jnp.float32)

    grid = (Bp // block_b,)

    cost = pl.CostEstimate(
        flops=2 * Bp * Din * Dout,
        transcendentals=Bp * Dout,
        bytes_accessed=(Bp * Din + Din * Dout) * 2
        + (Bp * Dout + Dout + Bp) * 4,
    )

    out = pl.pallas_call(
        scaled_poisson_kernel,
        out_shape=jax.ShapeDtypeStruct((Bp, Dout), jnp.float32),
        grid_spec=pltpu.PrefetchScalarGridSpec(
            num_scalar_prefetch=0,
            grid=grid,
            in_specs=[
                pl.BlockSpec((block_b, Din), lambda i: (i, 0)),   # x tile
                pl.BlockSpec((Din, Dout), lambda i: (0, 0)),      # resident W
                pl.BlockSpec((1, Dout), lambda i: (0, 0)),        # resident b
                pl.BlockSpec((block_b, 1), lambda i: (i, 0)),     # l tile
            ],
            out_specs=pl.BlockSpec((block_b, Dout), lambda i: (i, 0)),
        ),
        compiler_params=pltpu.CompilerParams(
            dimension_semantics=("parallel",)),
        cost_estimate=cost,
    )(x_bf, w_bf, b2, l_f)

    return out[:B] if pad else out


def reference_bf16(x, w_t, b, l):
    """Reference that mirrors the kernel's bf16-input / f32-accumulate matmul."""
    logits = jnp.dot(x.astype(jnp.bfloat16), w_t.astype(jnp.bfloat16),
                     preferred_element_type=jnp.float32) + b
    p = jax.nn.softmax(logits, axis=-1)
    return p * l


def reference_f32(x, w_t, b, l):
    """Full-f32 reference matching the PyTorch module's math."""
    logits = x @ w_t + b
    p = jax.nn.softmax(logits, axis=-1)
    return p * l


if __name__ == "__main__":
    # Shapes consistent with the module: in_features=32, out_features=128, batch=8.
    B, IN_FEATURES, OUT_FEATURES = 8, 32, 128

    key = jax.random.PRNGKey(0)
    kx, kw, kb, kl = jax.random.split(key, 4)

    x = jax.random.normal(kx, (B, IN_FEATURES), dtype=jnp.float32)

    # Deterministic parameter init (synthetic; mimics nn.Linear's uniform init range).
    bound = 1.0 / jnp.sqrt(IN_FEATURES)
    w = jax.random.uniform(kw, (OUT_FEATURES, IN_FEATURES),
                           minval=-bound, maxval=bound, dtype=jnp.float32)
    b = jax.random.uniform(kb, (OUT_FEATURES,),
                           minval=-bound, maxval=bound, dtype=jnp.float32)
    w_t = w.T                                # (IN, OUT) for the kernel layout
    b2 = b.reshape(1, OUT_FEATURES)

    # Scale `l`: positive per-row scalar, broadcast over the feature axis.
    l = jax.random.uniform(kl, (B, 1), minval=1.0, maxval=10.0, dtype=jnp.float32)

    rate = scaled_poisson_rate(x, w_t, b2, l)
    rate = jax.block_until_ready(rate)

    # Mirror the module's runtime asserts on the Poisson rate (host-side checks).
    assert bool(jnp.any(rate > 1e-5)) and bool(jnp.any(rate < 1000.0))
    assert not bool(jnp.any(jnp.isnan(rate)))

    # Tight check against a reference that uses the same bf16 matmul inputs.
    ref_bf = reference_bf16(x, w_t, b2, l)
    assert jnp.allclose(rate, ref_bf, atol=1e-6, rtol=1e-5)

    # Loose semantic check against the full-f32 module math (bf16 matmul error).
    ref_f32 = reference_f32(x, w_t, b2, l)
    assert jnp.allclose(rate, ref_f32, atol=5e-3, rtol=5e-2)

    print("KERNEL_OK")
</pallas_src>

<mosaic_0001>
module attributes {stable_mosaic.version = 11 : i64} {
  func.func @scaled_poisson_kernel(%arg0: i32, %arg1: memref<8x32xbf16, #tpu.memory_space<vmem>>, %arg2: memref<32x128xbf16, #tpu.memory_space<vmem>>, %arg3: memref<1x128xf32, #tpu.memory_space<vmem>>, %arg4: memref<8x1xf32, #tpu.memory_space<vmem>>, %arg5: memref<8x128xf32, #tpu.memory_space<vmem>>) attributes {dimension_semantics = [#tpu.dimension_semantics<parallel>], iteration_bounds = array<i64: 1>, scalar_prefetch = 0 : i64, scratch_operands = 0 : i64, tpu.core_type = #tpu.core_type<tc>, window_params = [{transform_indices = @transform_0, window_bounds = array<i64: 8, 32>}, {pipeline_mode = #tpu.pipeline_mode<synchronous>, transform_indices = @transform_1, window_bounds = array<i64: 32, 128>}, {pipeline_mode = #tpu.pipeline_mode<synchronous>, transform_indices = @transform_2, window_bounds = array<i64: 1, 128>}, {transform_indices = @transform_3, window_bounds = array<i64: 8, 1>}, {transform_indices = @transform_4, window_bounds = array<i64: 8, 128>}]} {
    %c0 = arith.constant 0 : index
    %c0_0 = arith.constant 0 : index
    %0 = vector.load %arg1[%c0, %c0_0] : memref<8x32xbf16, #tpu.memory_space<vmem>>, vector<8x32xbf16>
    %c0_1 = arith.constant 0 : index
    %c0_2 = arith.constant 0 : index
    %1 = vector.load %arg2[%c0_1, %c0_2] : memref<32x128xbf16, #tpu.memory_space<vmem>>, vector<32x128xbf16>
    %cst = arith.constant dense<0.000000e+00> : vector<8x128xf32>
    %2 = tpu.matmul %0, %1, %cst {dimension_numbers = #tpu.dot_dimension_numbers<[1], [0], [0], [1], [0, 0, 1, 1], [], []>} : vector<8x32xbf16>, vector<32x128xbf16>, vector<8x128xf32> -> vector<8x128xf32>
    %c0_3 = arith.constant 0 : index
    %c0_4 = arith.constant 0 : index
    %3 = vector.load %arg3[%c0_3, %c0_4] : memref<1x128xf32, #tpu.memory_space<vmem>>, vector<1x128xf32>
    %4 = vector.broadcast %3 : vector<1x128xf32> to vector<8x128xf32>
    %5 = arith.addf %2, %4 : vector<8x128xf32>
    %cst_5 = arith.constant dense<0xFF800000> : vector<8xf32>
    %6 = vector.multi_reduction <maximumf>, %5, %cst_5 [1] : vector<8x128xf32> to vector<8xf32>
    %7 = vector.shape_cast %6 : vector<8xf32> to vector<8x1xf32>
    %8 = vector.broadcast %7 : vector<8x1xf32> to vector<8x128xf32>
    %9 = arith.subf %5, %8 : vector<8x128xf32>
    %10 = math.exp %9 : vector<8x128xf32>
    %cst_6 = arith.constant dense<0.000000e+00> : vector<8xf32>
    %11 = vector.multi_reduction <add>, %10, %cst_6 [1] : vector<8x128xf32> to vector<8xf32>
    %12 = vector.shape_cast %11 : vector<8xf32> to vector<8x1xf32>
    %13 = tpu.reciprocal %12 {approx = true} : vector<8x1xf32> -> vector<8x1xf32>
    %14 = arith.mulf %12, %13 : vector<8x1xf32>
    %cst_7 = arith.constant 2.000000e+00 : f32
    %15 = vector.broadcast %cst_7 : f32 to vector<8x1xf32>
    %16 = arith.subf %15, %14 : vector<8x1xf32>
    %17 = arith.mulf %13, %16 : vector<8x1xf32>
    %c0_8 = arith.constant 0 : index
    %c0_9 = arith.constant 0 : index
    %18 = vector.load %arg4[%c0_8, %c0_9] : memref<8x1xf32, #tpu.memory_space<vmem>>, vector<8x1xf32>
    %19 = arith.mulf %18, %17 : vector<8x1xf32>
    %20 = vector.broadcast %19 : vector<8x1xf32> to vector<8x128xf32>
    %21 = arith.mulf %10, %20 : vector<8x128xf32>
    %c0_10 = arith.constant 0 : index
    %c0_11 = arith.constant 0 : index
    %22 = vector.load %arg5[%c0_10, %c0_11] : memref<8x128xf32, #tpu.memory_space<vmem>>, vector<8x128xf32>
    tpu.vector_store %arg5[%c0_10, %c0_11], %21 {strides = array<i32>} : memref<8x128xf32, #tpu.memory_space<vmem>>, vector<8x128xf32>,
    return
  }
  func.func @transform_0(%arg0: i32) -> (i32, i32) {
    %c0_i32 = arith.constant 0 : i32
    %c0_i32_0 = arith.constant 0 : i32
    return %arg0, %c0_i32 : i32, i32
  }
  func.func @transform_1(%arg0: i32) -> (i32, i32) {
    %c0_i32 = arith.constant 0 : i32
    %c0_i32_0 = arith.constant 0 : i32
    %c0_i32_1 = arith.constant 0 : i32
    return %c0_i32, %c0_i32_0 : i32, i32
  }
  func.func @transform_2(%arg0: i32) -> (i32, i32) {
    %c0_i32 = arith.constant 0 : i32
    %c0_i32_0 = arith.constant 0 : i32
    %c0_i32_1 = arith.constant 0 : i32
    return %c0_i32, %c0_i32_0 : i32, i32
  }
  func.func @transform_3(%arg0: i32) -> (i32, i32) {
    %c0_i32 = arith.constant 0 : i32
    %c0_i32_0 = arith.constant 0 : i32
    return %arg0, %c0_i32 : i32, i32
  }
  func.func @transform_4(%arg0: i32) -> (i32, i32) {
    %c0_i32 = arith.constant 0 : i32
    %c0_i32_0 = arith.constant 0 : i32
    return %arg0, %c0_i32 : i32, i32
  }
}

</mosaic_0001>

<llo_original>
// kernel: tpu_custom_call.1
$region0: #{tpu_custom_call.1}
  #allocation0 [shape = 'u32[]', space=smem, size = 0x4, offset = 0x4, fixed_abs, tag = 'smem constant byte address 0x4 - core index']
  #allocation1 [shape = 'u32[144,128]{1,0:T(1,128)}', space=vmem, size = 0x12000, scoped, tag = 'internal scratch']
  %s0 = inlined_call_operand.vmem [shape: bf16[8,32], index: 0, kind: input, shape index: {}]
  %s1 = inlined_call_operand.hbm [shape: bf16[32,128], index: 1, kind: input, shape index: {}]
  %s2 = inlined_call_operand.vmem [shape: f32[1,128], index: 2, kind: input, shape index: {}]
  %s3 = inlined_call_operand.vmem [shape: f32[8,1], index: 3, kind: input, shape index: {}]
  %s4 = inlined_call_operand.hbm [shape: f32[8,128], index: 4, kind: output, shape index: {}]
  %s5 = sld [smem:[#allocation0]]
  $region30: #{tpu_custom_call.1} parent=0
    _
  %s7 = ssub.s32 1, %s5
  %s8 = scalar_select 0, %s7, %s5
  $region1: #{tpu_custom_call.1} parent=0
    #allocation2 [shape = 'u8[8192]{0}', space=vmem, size = 0x2000, scoped, tag = 'input window, operand 1, single buffered']
    #allocation3 [shape = 's32[1]{0}', space=sflag, size = 0x4, scoped, tag = 'scoped memory for tpu_custom_call.1']
    #allocation4 [shape = 's32[1]{0}', space=sflag, size = 0x4, scoped, tag = 'scoped memory for tpu_custom_call.1']
    #allocation5 [shape = 'u8[4096]{0}', space=vmem, size = 0x1000, scoped, tag = 'output window, operand 0, single buffered']
    %9 = vsyncpa [#allocation3], 0
    %10 = vsyncpa [#allocation4], 0
    // Predicated region
    $region2: #{tpu_custom_call.1} parent=1 // pred_check
      _
    $region3: #{tpu_custom_call.1} parent=1 // pred_check_branch
      %12 = sbr.rel (0) target = $region5
    $region4: #{tpu_custom_call.1} parent=1 // pred_region
      _
    $region5: #{tpu_custom_call.1} parent=1 // pred_fallthru
      _
    // Predicated region
    $region6: #{tpu_custom_call.1} parent=1 // pred_check
      _
    $region7: #{tpu_custom_call.1} parent=1 // pred_check_branch
      %14 = sbr.rel (0) target = $region9
    $region8: #{tpu_custom_call.1} parent=1 // pred_region
      %s16 = ssub.s32 256, 256
      %17 = vsyncadd [#allocation3], %s16
      %s18 = sshll.u32 [#allocation2], 4
      %s19 = int_to_ptr.vmem [resolvable:$true] %s18
      %24 = dma.hbm_to_vmem [thread:$0]  %s1, 256, %s19, [#allocation3], 64, 64, 4
    $region9: #{tpu_custom_call.1} parent=1 // pred_fallthru
      _
    // Predicated region
    $region10: #{tpu_custom_call.1} parent=1 // pred_check
      _
    $region11: #{tpu_custom_call.1} parent=1 // pred_check_branch
      %26 = sbr.rel (0) target = $region13
    $region12: #{tpu_custom_call.1} parent=1 // pred_region
      _
    $region13: #{tpu_custom_call.1} parent=1 // pred_fallthru
      _
    // Predicated region
    $region14: #{tpu_custom_call.1} parent=1 // pred_check
      _
    $region15: #{tpu_custom_call.1} parent=1 // pred_check_branch
      %28 = sbr.rel (0) target = $region17
    $region16: #{tpu_custom_call.1} parent=1 // pred_region
      _
    $region17: #{tpu_custom_call.1} parent=1 // pred_fallthru
      _
    // Predicated region
    $region18: #{tpu_custom_call.1} parent=1 // pred_check
      _
    $region19: #{tpu_custom_call.1} parent=1 // pred_check_branch
      %30 = sbr.rel (0) target = $region21
    $region20: #{tpu_custom_call.1} parent=1 // pred_region
      %31 = dma.done [#allocation3], 256
    $region21: #{tpu_custom_call.1} parent=1 // pred_fallthru
      _
    %v33 = vld [vmem:[%s0] sm:$0xf]
    %v34 = vld [vmem:[#allocation2] sm:$0xf]
    %v35 = vld [vmem:[#allocation2 + $0x4] sm:$0xf]
    %v36 = vld [vmem:[#allocation2 + $0x8] sm:$0xf]
    %v37 = vld [vmem:[#allocation2 + $0xc] sm:$0xf]
    %v38 = vld [vmem:[%s2] sm:$0x1]
    %v40 = vlaneseq
    %v41 = vshrl.u32 %v40, 7
    %v42 = vsub.s32 0, %v41
    %v43 = vrot.slane %v38, %v42
    %v49 = vunpack.c.l.b16 %v34
    %v50 = vunpack.c.l.b16 %v35
    %v51 = vunpack.c.l.b16 %v36
    %v52 = vunpack.c.l.b16 %v37
    %v53 = vpack.c.b16 %v50, %v49
    %v54 = vpack.c.b16 %v52, %v51
    %vm57 = vcmask 261120
    %v59 = vsel %vm57, %v33, 0
    %61 = vmatprep.subr.bf16.mxu0 0
    %62 = vmatpush1.bf16.msra.mxu0 0
    %63 = vmatprep.subr.bf16.mxu0 0
    %64 = vmatpush1.bf16.msra.mxu0 0
    %65 = vmatprep.subr.bf16.mxu0 0
    %66 = vmatpush1.bf16.msra.mxu0 0
    %67 = vmatprep.subr.bf16.mxu0 0
    %68 = vmatpush1.bf16.msra.mxu0 0
    %69 = vmatprep.subr.bf16.mxu0 0
    %70 = vmatpush1.bf16.msra.mxu0 0
    %71 = vmatprep.subr.bf16.mxu0 0
    %72 = vmatpush1.bf16.msra.mxu0 0
    %73 = vmatprep.subr.bf16.mxu0 0
    %74 = vmatpush1.bf16.msra.mxu0 %v54
    %75 = vmatprep.subr.bf16.mxu0 0
    %76 = vmatpush1.bf16.msra.mxu0 %v53
    %77 = vmatprep.subr.bf16.mxu0 0
    %78 = vmatpush2.bf16.msra.mxu0 0
    %79 = vmatprep.subr.bf16.mxu0 0
    %80 = vmatpush2.bf16.msra.mxu0 0
    %81 = vmatprep.subr.bf16.mxu0 0
    %82 = vmatpush2.bf16.msra.mxu0 0
    %83 = vmatprep.subr.bf16.mxu0 0
    %84 = vmatpush2.bf16.msra.mxu0 0
    %85 = vmatprep.subr.bf16.mxu0 0
    %86 = vmatpush2.bf16.msra.mxu0 0
    %87 = vmatprep.subr.bf16.mxu0 0
    %88 = vmatpush2.bf16.msra.mxu0 0
    %89 = vmatprep.subr.bf16.mxu0 0
    %90 = vmatpush2.bf16.msra.mxu0 0
    %91 = vmatprep.subr.bf16.mxu0 0
    %92 = vmatpush2.bf16.msra.mxu0 0
    %93 = vmatprep.mubr.bf16.mxu0 0
    %94 = vmatmul.mubr.bf16.gmra.mxu0 %v59
    %v95 = vpop.f32.mrf.mxu0
    %v96 = vadd.f32 %v43, %v95
    %v97 = vpop.f32.mrf.mxu0
    %v98 = vpop.f32.mrf.mxu0
    %v99 = vpop.f32.mrf.mxu0
    %100 = vdwg.mxu0
    %101 = vmax.xlane.f32.xlu0 %v96
    %v102 = vpop.xlane.xlu0 %101
    %v103 = vsub.f32 %v96, %v102
    %v104 = vmul.f32 %v103, 1.442695
    %v105 = vpow.pop %v104
    %106 = vadd.xlane.f32.xlu0 %v105
    %v107 = vpop.xlane.xlu0 %106
    %v108 = vrcp.pop %v107
    %v109 = vmul.f32 %v107, %v108
    %v110 = vsub.f32 2.0, %v109
    %v111 = vmul.f32 %v108, %v110
    %v112 = vld [vmem:[%s3] sm:$0xff]
    %v113 = vmul.f32 %v112, %v111
    %115 = vset.pattern.permute.xlu0 0
    %116 = vperm.xlu0 %115, %v113
    %v117 = vpop.permute.xlu0 %116
    %v119 = vmul.f32 %v105, %v117
    %120 = vst [vmem:[#allocation5] sm:$0xff] %v119
    // Predicated region
    $region22: #{tpu_custom_call.1} parent=1 // pred_check
      _
    $region23: #{tpu_custom_call.1} parent=1 // pred_check_branch
      %122 = sbr.rel (0) target = $region25
    $region24: #{tpu_custom_call.1} parent=1 // pred_region
      %s124 = ssub.s32 128, 128
      %125 = vsyncadd [#allocation4], %s124
      %s127 = sshll.u32 [#allocation5], 4
      %s128 = int_to_ptr.vmem [resolvable:$true] %s127
      %130 = dma.vmem_to_hbm [thread:$0]  %s128, 128, %s4, [#allocation4]
    $region25: #{tpu_custom_call.1} parent=1 // pred_fallthru
      _
    // Predicated region
    $region26: #{tpu_custom_call.1} parent=1 // pred_check
      _
    $region27: #{tpu_custom_call.1} parent=1 // pred_check_branch
      %132 = sbr.rel (0) target = $region29
    $region28: #{tpu_custom_call.1} parent=1 // pred_region
      %133 = dma.done [#allocation4], 128
    $region29: #{tpu_custom_call.1} parent=1 // pred_fallthru
      _
    %134 = vsyncpa [#allocation3], 1
    %135 = vsyncpa [#allocation4], 1

</llo_original>
